<compile_context>
chip_gen: v7x
topology: tpu7x:2x2x1
jax: 0.10.0
libtpu: 0.0.40
codegen_flags: <defaults>
</compile_context>

<pallas_src>
import functools

import jax
import jax.numpy as jnp
from jax.experimental import pallas as pl
from jax.experimental.pallas import tpu as pltpu

# ---- config (mirrors `cf` in the reference repo) ----
NUM_PARALLEL = 2
USE_EXCHANGE = False  # TODO(synk): Exchange (channel-exchange gated by InstanceNorm affine weights) is disabled by config.
INPUT_DIM = 3
NUM_FILTER = 8
OUTPUT_DIM = 3
IMG = 256  # 8 stride-2 convs require spatial >= 2**8
EPS = 1e-5

_VMEM_LIMIT = 48 * 1024 * 1024  # <= v7x 64 MiB physical; actual per-step use is a few MB


def _round_up(v, m):
    return -(-v // m) * m


# ------------------------------------------------------------------
# Pallas kernels
# ------------------------------------------------------------------
def _packed_conv_kernel(x_ref, w_ref, b_ref, *rest,
                        offsets, mp, act, out_act, inorm, inv_count):
    """Fused 2x2 stride-1 conv over a flattened packed activation.

    x_ref : (T, Cp)   bf16   flattened (row-major) packed activation (+ zero tail rows)
    w_ref : (4, Cp, Cout)    one (Cp, Cout) weight slab per 2x2 shift
    b_ref : (1, Cout) fp32
    mask  : (Mp, 1)   fp32   1 for valid flat rows, 0 for wrap/garbage rows (only if inorm)
    out   : (Mp, Cout)
    """
    if inorm:
        m_ref, o_ref = rest
    else:
        (o_ref,) = rest
    cout = o_ref.shape[-1]

    acc = jnp.zeros((mp, cout), jnp.float32)
    for q, off in enumerate(offsets):
        win = x_ref[pl.ds(off, mp), :]                      # shifted window, stays in VMEM
        if act == "lrelu":
            win = jnp.where(win >= 0, win, 0.2 * win)       # lrelu(0)=0 -> safe on zero-padding
        elif act == "relu":
            win = jnp.maximum(win, 0)
        acc = acc + jnp.dot(win, w_ref[q], preferred_element_type=jnp.float32)
    acc = acc + b_ref[...]

    if inorm:
        # InstanceNorm fused into the epilogue: biased variance over the valid rows only.
        mask = m_ref[...]                                   # (Mp, 1)
        mean = jnp.sum(acc * mask, axis=0, keepdims=True) * inv_count
        cen = acc - mean
        var = jnp.sum(cen * cen * mask, axis=0, keepdims=True) * inv_count
        acc = cen * jax.lax.rsqrt(var + EPS)

    if out_act == "tanh":
        acc = jnp.tanh(acc)

    o_ref[...] = acc.astype(o_ref.dtype)


def _instnorm_kernel(x_ref, o_ref):
    """Per-(sample, channel) normalization over the spatial (H*W) axis (fp32 stats)."""
    x = x_ref[...].astype(jnp.float32)                      # (HW, C)
    mean = jnp.mean(x, axis=0, keepdims=True)
    xc = x - mean
    var = jnp.mean(xc * xc, axis=0, keepdims=True)          # biased (matches InstanceNorm2d)
    o_ref[...] = (xc * jax.lax.rsqrt(var + EPS)).astype(o_ref.dtype)


# ------------------------------------------------------------------
# Kernel wrappers
# ------------------------------------------------------------------
def _packed_conv(xpk, w4, bias, *, act, inorm, out_act, out_dtype):
    """2x2 stride-1 'valid' conv over packed input xpk (N, A, B, Cp) -> (N, A-1, B-1, Cout)."""
    N, A, B, Cp = xpk.shape
    Cout = w4.shape[-1]
    Mp = (A - 1) * B                       # includes 1 garbage column per row (wrap of the flat trick)
    AB = A * B
    T = _round_up(AB + B, 8)               # zero tail so the largest shifted window stays in bounds

    flat = xpk.reshape(N, AB, Cp)
    flat = jnp.pad(flat, ((0, 0), (0, T - AB), (0, 0)))

    offsets = (0, 1, B, B + 1)             # (qi, qj) in {0,1}^2 -> flat row offset qi*B + qj
    inv_count = 1.0 / float((A - 1) * (B - 1))

    kernel = functools.partial(_packed_conv_kernel, offsets=offsets, mp=Mp,
                               act=act, out_act=out_act, inorm=inorm, inv_count=inv_count)

    in_specs = [
        pl.BlockSpec((None, T, Cp), lambda n: (n, 0, 0)),
        pl.BlockSpec((4, Cp, Cout), lambda n: (0, 0, 0)),
        pl.BlockSpec((1, Cout), lambda n: (0, 0)),
    ]
    args = [flat, w4, bias.reshape(1, Cout).astype(jnp.float32)]
    if inorm:
        col = jnp.arange(Mp, dtype=jnp.int32) % B
        mask = (col != (B - 1)).astype(jnp.float32).reshape(Mp, 1)
        in_specs.append(pl.BlockSpec((Mp, 1), lambda n: (0, 0)))
        args.append(mask)

    out = pl.pallas_call(
        kernel,
        out_shape=jax.ShapeDtypeStruct((N, Mp, Cout), out_dtype),
        grid=(N,),
        in_specs=in_specs,
        out_specs=pl.BlockSpec((None, Mp, Cout), lambda n: (n, 0, 0)),
        compiler_params=pltpu.CompilerParams(
            dimension_semantics=("parallel",),
            vmem_limit_bytes=_VMEM_LIMIT),
    )(*args)
    # drop the garbage column j == B-1
    return out.reshape(N, A - 1, B, Cout)[:, :, : B - 1, :]


def instance_norm(x):
    """InstanceNorm2d (affine weight=1, bias=0 at PyTorch init -> identity affine)."""
    # TODO(synk): channels sit on the 128-lane axis (C=8..64) -> partially masked stores; these
    # decoder-norm tensors are tiny so the lane-dense relayout was not worth the extra transposes.
    N, H, W, C = x.shape
    xr = x.reshape(N, H * W, C)
    out = pl.pallas_call(
        _instnorm_kernel,
        out_shape=jax.ShapeDtypeStruct((N, H * W, C), x.dtype),
        grid=(N,),
        in_specs=[pl.BlockSpec((None, H * W, C), lambda n: (n, 0, 0))],
        out_specs=pl.BlockSpec((None, H * W, C), lambda n: (n, 0, 0)),
        compiler_params=pltpu.CompilerParams(dimension_semantics=("parallel",)),
    )(xr)
    return out.reshape(N, H, W, C)


# ------------------------------------------------------------------
# Conv / Deconv blocks (JAX glue = pad + pack only; no im2col tensors)
# ------------------------------------------------------------------
def conv_block(x, wb, *, act, inorm):
    """ConvBlock: conv(lrelu(x)) k=4 s=2 p=1 [+ InstanceNorm], via space-to-depth + 2x2 conv."""
    w4, b = wb
    N, H, W, Cin = x.shape
    Ho, Wo = H // 2, W // 2
    A, B = Ho + 1, Wo + 1
    xp = jnp.pad(x, ((0, 0), (1, 1), (1, 1), (0, 0)))
    # space-to-depth: y[a,b,(pi,pj,ci)] = xp[2a+pi, 2b+pj, ci]
    y = xp.reshape(N, A, 2, B, 2, Cin).transpose(0, 1, 3, 2, 4, 5).reshape(N, A, B, 4 * Cin)
    return _packed_conv(y, w4, b, act=act, inorm=inorm, out_act="none",
                        out_dtype=jnp.bfloat16)


def deconv_block(x, wb, *, inorm=True, out_act="none", out_dtype=jnp.bfloat16):
    """DeconvBlock: conv_transpose(relu(x)) k=4 s=2 p=1 [+ InstanceNorm], via sub-pixel phases."""
    w4, bd = wb                                   # (4, Cin, 4*Cout), (4*Cout,)
    N, H, W, Cin = x.shape
    Cout = w4.shape[-1] // 4
    xp = jnp.pad(x, ((0, 0), (1, 1), (1, 1), (0, 0)))      # (N, H+2, W+2, Cin)
    # one 2x2 stride-1 conv emitting all 4 output phases as packed channels
    z = _packed_conv(xp, w4, bd, act="relu", inorm=False, out_act=out_act,
                     out_dtype=out_dtype)                   # (N, H+1, W+1, 4*Cout)
    z = z.reshape(N, H + 1, W + 1, 2, 2, Cout)
    p00 = z[:, 0:H,     0:W,     0, 0, :]
    p01 = z[:, 0:H,     1:W + 1, 0, 1, :]
    p10 = z[:, 1:H + 1, 0:W,     1, 0, :]
    p11 = z[:, 1:H + 1, 1:W + 1, 1, 1, :]
    out = jnp.stack([jnp.stack([p00, p01], axis=3),
                     jnp.stack([p10, p11], axis=3)], axis=2)  # (N, H, 2, W, 2, Cout)
    out = out.reshape(N, 2 * H, 2 * W, Cout)
    if inorm:
        out = instance_norm(out)
    # TODO(synk): nn.Dropout(0.5) is the identity here (deterministic / eval-mode forward).
    return out


# ------------------------------------------------------------------
# Weight packing (PyTorch layouts -> shifted-matmul layout)
# ------------------------------------------------------------------
def pack_conv_weight(w):
    """(Cout, Cin, 4, 4) Conv2d -> (4, 4*Cin, Cout): [qi*2+qj][(pi*2+pj)*Cin+ci, co] = w[co,ci,2qi+pi,2qj+pj]."""
    cout, cin = w.shape[0], w.shape[1]
    w6 = w.reshape(cout, cin, 2, 2, 2, 2)                   # (co, ci, qi, pi, qj, pj)
    return jnp.transpose(w6, (2, 4, 3, 5, 1, 0)).reshape(4, 4 * cin, cout)


def pack_deconv_weight(w):
    """(Cin, Cout, 4, 4) ConvTranspose2d -> (4, Cin, 4*Cout) sub-pixel phase sub-kernels."""
    cin, cout = w.shape[0], w.shape[1]
    wr = w[:, :, ::-1, ::-1]                                # spatial flip
    w6 = wr.reshape(cin, cout, 2, 2, 2, 2)                  # (ci, co, qi, pi, qj, pj)
    return jnp.transpose(w6, (2, 4, 0, 3, 5, 1)).reshape(4, cin, 4 * cout)


def init_params(key):
    params = {}

    def nrm(k, shape):
        return 0.02 * jax.random.normal(k, shape, dtype=jnp.float32)  # normal_weight_init

    conv_specs = [
        ("conv1", INPUT_DIM, NUM_FILTER),
        ("conv2", NUM_FILTER, NUM_FILTER * 2),
        ("conv3", NUM_FILTER * 2, NUM_FILTER * 4),
        ("conv4", NUM_FILTER * 4, NUM_FILTER * 8),
        ("conv5", NUM_FILTER * 8, NUM_FILTER * 8),
        ("conv6", NUM_FILTER * 8, NUM_FILTER * 8),
        ("conv7", NUM_FILTER * 8, NUM_FILTER * 8),
        ("conv8", NUM_FILTER * 8, NUM_FILTER * 8),
    ]
    deconv_specs = [
        ("deconv1", NUM_FILTER * 8, NUM_FILTER * 8),
        ("deconv2", NUM_FILTER * 16, NUM_FILTER * 8),
        ("deconv3", NUM_FILTER * 16, NUM_FILTER * 8),
        ("deconv4", NUM_FILTER * 16, NUM_FILTER * 8),
        ("deconv5", NUM_FILTER * 16, NUM_FILTER * 4),
        ("deconv6", NUM_FILTER * 8, NUM_FILTER * 2),
        ("deconv7", NUM_FILTER * 4, NUM_FILTER),
        ("deconv8", NUM_FILTER * 2, OUTPUT_DIM),
    ]
    keys = jax.random.split(key, 2 * (len(conv_specs) + len(deconv_specs)))
    ki = 0
    for name, cin, cout in conv_specs:
        w = nrm(keys[ki], (cout, cin, 4, 4)); ki += 1       # PyTorch Conv2d layout
        b = nrm(keys[ki], (cout,)); ki += 1
        params[name] = (pack_conv_weight(w).astype(jnp.bfloat16), b.astype(jnp.float32))
    for name, cin, cout in deconv_specs:
        w = nrm(keys[ki], (cin, cout, 4, 4)); ki += 1       # PyTorch ConvTranspose2d layout
        b = nrm(keys[ki], (cout,)); ki += 1
        params[name] = (pack_deconv_weight(w).astype(jnp.bfloat16),
                        jnp.tile(b, 4).astype(jnp.float32))  # bias replicated per output phase
    params["alpha"] = jnp.ones((NUM_PARALLEL,), jnp.float32)
    return params


# ------------------------------------------------------------------
# Generator forward (both parallel branches batched into N)
# ------------------------------------------------------------------
def unet_forward(p, x):
    """x: (N, H, W, 3) bf16 -> (N, H, W, 3) fp32 (tanh)."""
    e1 = conv_block(x,  p["conv1"], act="none",  inorm=False)
    e2 = conv_block(e1, p["conv2"], act="lrelu", inorm=True)
    e3 = conv_block(e2, p["conv3"], act="lrelu", inorm=True)
    e4 = conv_block(e3, p["conv4"], act="lrelu", inorm=True)
    e5 = conv_block(e4, p["conv5"], act="lrelu", inorm=True)
    e6 = conv_block(e5, p["conv6"], act="lrelu", inorm=True)
    e7 = conv_block(e6, p["conv7"], act="lrelu", inorm=True)
    e8 = conv_block(e7, p["conv8"], act="lrelu", inorm=False)
    d1 = jnp.concatenate([deconv_block(e8, p["deconv1"]), e7], axis=-1)
    d2 = jnp.concatenate([deconv_block(d1, p["deconv2"]), e6], axis=-1)
    d3 = jnp.concatenate([deconv_block(d2, p["deconv3"]), e5], axis=-1)
    d4 = jnp.concatenate([deconv_block(d3, p["deconv4"]), e4], axis=-1)
    d5 = jnp.concatenate([deconv_block(d4, p["deconv5"]), e3], axis=-1)
    d6 = jnp.concatenate([deconv_block(d5, p["deconv6"]), e2], axis=-1)
    d7 = jnp.concatenate([deconv_block(d6, p["deconv7"]), e1], axis=-1)
    d8 = deconv_block(d7, p["deconv8"], inorm=False, out_act="tanh", out_dtype=jnp.float32)
    return d8


def generator_forward(params, x_list):
    """x_list: list of NCHW tensors (one per parallel branch). Returns (out_list, alpha_soft)."""
    xs = jnp.stack([jnp.transpose(x, (0, 2, 3, 1)) for x in x_list], axis=0)  # (P, Nb, H, W, C)
    P, Nb, H, W, C = xs.shape
    xb = xs.reshape(P * Nb, H, W, C).astype(jnp.bfloat16)   # batch the branches (shared weights)
    out = unet_forward(params, xb)                          # (P*Nb, H, W, Cout) fp32
    out = out.reshape(P, Nb, H, W, OUTPUT_DIM)
    alpha_soft = jax.nn.softmax(params["alpha"], axis=0)
    ens = jnp.einsum("p,pnhwc->nhwc", alpha_soft, out)      # detach == no-grad in fwd
    outs = [jnp.transpose(out[l], (0, 3, 1, 2)) for l in range(P)]
    outs.append(jnp.transpose(ens, (0, 3, 1, 2)))
    return outs, alpha_soft


# ------------------------------------------------------------------
# Small-shape self-test vs. XLA conv references (packing / fusion correctness)
# ------------------------------------------------------------------
def _ref_conv(x, w, b):
    whwio = jnp.transpose(w, (2, 3, 1, 0))
    dn = jax.lax.conv_dimension_numbers(x.shape, whwio.shape, ("NHWC", "HWIO", "NHWC"))
    y = jax.lax.conv_general_dilated(x, whwio, (2, 2), ((1, 1), (1, 1)), dimension_numbers=dn)
    return y + b.reshape(1, 1, 1, -1)


def _ref_deconv(x, w, b):
    wf = w[:, :, ::-1, ::-1]
    whwio = jnp.transpose(wf, (2, 3, 0, 1))
    dn = jax.lax.conv_dimension_numbers(x.shape, whwio.shape, ("NHWC", "HWIO", "NHWC"))
    y = jax.lax.conv_general_dilated(x, whwio, (1, 1), ((2, 2), (2, 2)),
                                     lhs_dilation=(2, 2), dimension_numbers=dn)
    return y + b.reshape(1, 1, 1, -1)


def _ref_in(y):
    m = jnp.mean(y, axis=(1, 2), keepdims=True)
    v = jnp.mean((y - m) ** 2, axis=(1, 2), keepdims=True)
    return (y - m) * jax.lax.rsqrt(v + EPS)


def _self_test():
    key = jax.random.PRNGKey(42)
    k1, k2, k3, k4, k5, k6 = jax.random.split(key, 6)
    # encoder block (lrelu + conv + fused InstanceNorm)
    N, H, W, Cin, Cout = 2, 8, 8, 4, 6
    xb = jax.random.normal(k1, (N, H, W, Cin), jnp.float32).astype(jnp.bfloat16)
    wb = (0.2 * jax.random.normal(k2, (Cout, Cin, 4, 4), jnp.float32)).astype(jnp.bfloat16)
    b = 0.1 * jax.random.normal(k3, (Cout,), jnp.float32)
    got = conv_block(xb, (pack_conv_weight(wb), b), act="lrelu", inorm=True).astype(jnp.float32)
    xr = xb.astype(jnp.float32)
    ref = _ref_in(_ref_conv(jnp.where(xr >= 0, xr, 0.2 * xr), wb.astype(jnp.float32), b))
    assert float(jnp.max(jnp.abs(got - ref))) < 0.15, "conv_block mismatch"
    # decoder block (relu + sub-pixel conv_transpose + InstanceNorm)
    Cin2, Cout2 = 5, 6
    x2 = jax.random.normal(k4, (N, 4, 4, Cin2), jnp.float32).astype(jnp.bfloat16)
    w2 = (0.2 * jax.random.normal(k5, (Cin2, Cout2, 4, 4), jnp.float32)).astype(jnp.bfloat16)
    b2 = 0.1 * jax.random.normal(k6, (Cout2,), jnp.float32)
    got2 = deconv_block(x2, (pack_deconv_weight(w2), jnp.tile(b2, 4)), inorm=True).astype(jnp.float32)
    ref2 = _ref_in(_ref_deconv(jnp.maximum(x2.astype(jnp.float32), 0.0), w2.astype(jnp.float32), b2))
    assert float(jnp.max(jnp.abs(got2 - ref2))) < 0.15, "deconv_block mismatch"


if __name__ == "__main__":
    _self_test()

    key = jax.random.PRNGKey(0)
    pkey, k0, k1 = jax.random.split(key, 3)
    params = init_params(pkey)

    x_list = [
        jax.random.normal(k0, (1, INPUT_DIM, IMG, IMG), jnp.float32),
        jax.random.normal(k1, (1, INPUT_DIM, IMG, IMG), jnp.float32),
    ]

    fwd = jax.jit(generator_forward)
    outs, alpha_soft = fwd(params, x_list)
    (outs, alpha_soft) = jax.block_until_ready((outs, alpha_soft))

    assert len(outs) == NUM_PARALLEL + 1
    for o in outs:
        assert o.shape == (1, OUTPUT_DIM, IMG, IMG)
        assert bool(jnp.all(jnp.isfinite(o)))
    assert alpha_soft.shape == (NUM_PARALLEL,)
    print("KERNEL_OK")
</pallas_src>

<mosaic_0001>
module attributes {stable_mosaic.version = 11 : i64} {
  func.func @_packed_conv_kernel(%arg0: i32, %arg1: memref<1x32x16xbf16, #tpu.memory_space<vmem>>, %arg2: memref<4x16x6xbf16, #tpu.memory_space<vmem>>, %arg3: memref<1x6xf32, #tpu.memory_space<vmem>>, %arg4: memref<20x1xf32, #tpu.memory_space<vmem>>, %arg5: memref<1x20x6xbf16, #tpu.memory_space<vmem>>) attributes {dimension_semantics = [#tpu.dimension_semantics<parallel>], iteration_bounds = array<i64: 2>, scalar_prefetch = 0 : i64, scratch_operands = 0 : i64, tpu.core_type = #tpu.core_type<tc>, window_params = [{transform_indices = @transform_0, window_bounds = array<i64: 1, 32, 16>}, {pipeline_mode = #tpu.pipeline_mode<synchronous>, transform_indices = @transform_1, window_bounds = array<i64: 4, 16, 6>}, {pipeline_mode = #tpu.pipeline_mode<synchronous>, transform_indices = @transform_2, window_bounds = array<i64: 1, 6>}, {pipeline_mode = #tpu.pipeline_mode<synchronous>, transform_indices = @transform_3, window_bounds = array<i64: 20, 1>}, {transform_indices = @transform_4, window_bounds = array<i64: 1, 20, 6>}]} {
    %cst = arith.constant 0.000000e+00 : f32
    %0 = vector.broadcast %cst : f32 to vector<20x6xf32>
    %c0 = arith.constant 0 : index
    %c0_0 = arith.constant 0 : index
    %c0_1 = arith.constant 0 : index
    %1 = vector.load %arg1[%c0, %c0_0, %c0_1] : memref<1x32x16xbf16, #tpu.memory_space<vmem>>, vector<1x20x16xbf16>
    %2 = vector.shape_cast %1 : vector<1x20x16xbf16> to vector<20x16xbf16>
    %cst_2 = arith.constant 0.000000e+00 : bf16
    %3 = vector.broadcast %cst_2 : bf16 to vector<20x16xbf16>
    %4 = arith.cmpf oge, %2, %3 : vector<20x16xbf16>
    %cst_3 = arith.constant 2.001950e-01 : bf16
    %5 = vector.broadcast %cst_3 : bf16 to vector<20x16xbf16>
    %6 = arith.mulf %5, %2 : vector<20x16xbf16>
    %7 = arith.select %4, %2, %6 : vector<20x16xi1>, vector<20x16xbf16>
    %c0_4 = arith.constant 0 : index
    %c0_5 = arith.constant 0 : index
    %c0_6 = arith.constant 0 : index
    %8 = vector.load %arg2[%c0_4, %c0_5, %c0_6] : memref<4x16x6xbf16, #tpu.memory_space<vmem>>, vector<1x16x6xbf16>
    %9 = vector.shape_cast %8 : vector<1x16x6xbf16> to vector<16x6xbf16>
    %cst_7 = arith.constant dense<0.000000e+00> : vector<20x6xf32>
    %10 = tpu.matmul %7, %9, %cst_7 {dimension_numbers = #tpu.dot_dimension_numbers<[1], [0], [0], [1], [0, 0, 1, 1], [], []>} : vector<20x16xbf16>, vector<16x6xbf16>, vector<20x6xf32> -> vector<20x6xf32>
    %11 = arith.addf %0, %10 : vector<20x6xf32>
    %c0_8 = arith.constant 0 : index
    %c1 = arith.constant 1 : index
    %c0_9 = arith.constant 0 : index
    %12 = vector.load %arg1[%c0_8, %c1, %c0_9] : memref<1x32x16xbf16, #tpu.memory_space<vmem>>, vector<1x20x16xbf16>
    %13 = vector.shape_cast %12 : vector<1x20x16xbf16> to vector<20x16xbf16>
    %cst_10 = arith.constant 0.000000e+00 : bf16
    %14 = vector.broadcast %cst_10 : bf16 to vector<20x16xbf16>
    %15 = arith.cmpf oge, %13, %14 : vector<20x16xbf16>
    %cst_11 = arith.constant 2.001950e-01 : bf16
    %16 = vector.broadcast %cst_11 : bf16 to vector<20x16xbf16>
    %17 = arith.mulf %16, %13 : vector<20x16xbf16>
    %18 = arith.select %15, %13, %17 : vector<20x16xi1>, vector<20x16xbf16>
    %c1_12 = arith.constant 1 : index
    %c0_13 = arith.constant 0 : index
    %c0_14 = arith.constant 0 : index
    %19 = vector.load %arg2[%c1_12, %c0_13, %c0_14] : memref<4x16x6xbf16, #tpu.memory_space<vmem>>, vector<1x16x6xbf16>
    %20 = vector.shape_cast %19 : vector<1x16x6xbf16> to vector<16x6xbf16>
    %cst_15 = arith.constant dense<0.000000e+00> : vector<20x6xf32>
    %21 = tpu.matmul %18, %20, %cst_15 {dimension_numbers = #tpu.dot_dimension_numbers<[1], [0], [0], [1], [0, 0, 1, 1], [], []>} : vector<20x16xbf16>, vector<16x6xbf16>, vector<20x6xf32> -> vector<20x6xf32>
    %22 = arith.addf %11, %21 : vector<20x6xf32>
    %c0_16 = arith.constant 0 : index
    %c5 = arith.constant 5 : index
    %c0_17 = arith.constant 0 : index
    %23 = vector.load %arg1[%c0_16, %c5, %c0_17] : memref<1x32x16xbf16, #tpu.memory_space<vmem>>, vector<1x20x16xbf16>
    %24 = vector.shape_cast %23 : vector<1x20x16xbf16> to vector<20x16xbf16>
    %cst_18 = arith.constant 0.000000e+00 : bf16
    %25 = vector.broadcast %cst_18 : bf16 to vector<20x16xbf16>
    %26 = arith.cmpf oge, %24, %25 : vector<20x16xbf16>
    %cst_19 = arith.constant 2.001950e-01 : bf16
    %27 = vector.broadcast %cst_19 : bf16 to vector<20x16xbf16>
    %28 = arith.mulf %27, %24 : vector<20x16xbf16>
    %29 = arith.select %26, %24, %28 : vector<20x16xi1>, vector<20x16xbf16>
    %c2 = arith.constant 2 : index
    %c0_20 = arith.constant 0 : index
    %c0_21 = arith.constant 0 : index
    %30 = vector.load %arg2[%c2, %c0_20, %c0_21] : memref<4x16x6xbf16, #tpu.memory_space<vmem>>, vector<1x16x6xbf16>
    %31 = vector.shape_cast %30 : vector<1x16x6xbf16> to vector<16x6xbf16>
    %cst_22 = arith.constant dense<0.000000e+00> : vector<20x6xf32>
    %32 = tpu.matmul %29, %31, %cst_22 {dimension_numbers = #tpu.dot_dimension_numbers<[1], [0], [0], [1], [0, 0, 1, 1], [], []>} : vector<20x16xbf16>, vector<16x6xbf16>, vector<20x6xf32> -> vector<20x6xf32>
    %33 = arith.addf %22, %32 : vector<20x6xf32>
    %c0_23 = arith.constant 0 : index
    %c6 = arith.constant 6 : index
    %c0_24 = arith.constant 0 : index
    %34 = vector.load %arg1[%c0_23, %c6, %c0_24] : memref<1x32x16xbf16, #tpu.memory_space<vmem>>, vector<1x20x16xbf16>
    %35 = vector.shape_cast %34 : vector<1x20x16xbf16> to vector<20x16xbf16>
    %cst_25 = arith.constant 0.000000e+00 : bf16
    %36 = vector.broadcast %cst_25 : bf16 to vector<20x16xbf16>
    %37 = arith.cmpf oge, %35, %36 : vector<20x16xbf16>
    %cst_26 = arith.constant 2.001950e-01 : bf16
    %38 = vector.broadcast %cst_26 : bf16 to vector<20x16xbf16>
    %39 = arith.mulf %38, %35 : vector<20x16xbf16>
    %40 = arith.select %37, %35, %39 : vector<20x16xi1>, vector<20x16xbf16>
    %c3 = arith.constant 3 : index
    %c0_27 = arith.constant 0 : index
    %c0_28 = arith.constant 0 : index
    %41 = vector.load %arg2[%c3, %c0_27, %c0_28] : memref<4x16x6xbf16, #tpu.memory_space<vmem>>, vector<1x16x6xbf16>
    %42 = vector.shape_cast %41 : vector<1x16x6xbf16> to vector<16x6xbf16>
    %cst_29 = arith.constant dense<0.000000e+00> : vector<20x6xf32>
    %43 = tpu.matmul %40, %42, %cst_29 {dimension_numbers = #tpu.dot_dimension_numbers<[1], [0], [0], [1], [0, 0, 1, 1], [], []>} : vector<20x16xbf16>, vector<16x6xbf16>, vector<20x6xf32> -> vector<20x6xf32>
    %44 = arith.addf %33, %43 : vector<20x6xf32>
    %c0_30 = arith.constant 0 : index
    %c0_31 = arith.constant 0 : index
    %45 = vector.load %arg3[%c0_30, %c0_31] : memref<1x6xf32, #tpu.memory_space<vmem>>, vector<1x6xf32>
    %46 = vector.broadcast %45 : vector<1x6xf32> to vector<20x6xf32>
    %47 = arith.addf %44, %46 : vector<20x6xf32>
    %c0_32 = arith.constant 0 : index
    %c0_33 = arith.constant 0 : index
    %48 = vector.load %arg4[%c0_32, %c0_33] : memref<20x1xf32, #tpu.memory_space<vmem>>, vector<20x1xf32>
    %49 = vector.broadcast %48 : vector<20x1xf32> to vector<20x6xf32>
    %50 = arith.mulf %47, %49 : vector<20x6xf32>
    %cst_34 = arith.constant dense<0.000000e+00> : vector<6xf32>
    %51 = vector.multi_reduction <add>, %50, %cst_34 [0] : vector<20x6xf32> to vector<6xf32>
    %52 = vector.shape_cast %51 : vector<6xf32> to vector<1x6xf32>
    %cst_35 = arith.constant 6.250000e-02 : f32
    %53 = vector.broadcast %cst_35 : f32 to vector<1x6xf32>
    %54 = arith.mulf %52, %53 : vector<1x6xf32>
    %55 = vector.broadcast %54 : vector<1x6xf32> to vector<20x6xf32>
    %56 = arith.subf %47, %55 : vector<20x6xf32>
    %57 = arith.mulf %56, %56 : vector<20x6xf32>
    %58 = vector.broadcast %48 : vector<20x1xf32> to vector<20x6xf32>
    %59 = arith.mulf %57, %58 : vector<20x6xf32>
    %cst_36 = arith.constant dense<0.000000e+00> : vector<6xf32>
    %60 = vector.multi_reduction <add>, %59, %cst_36 [0] : vector<20x6xf32> to vector<6xf32>
    %61 = vector.shape_cast %60 : vector<6xf32> to vector<1x6xf32>
    %cst_37 = arith.constant 6.250000e-02 : f32
    %62 = vector.broadcast %cst_37 : f32 to vector<1x6xf32>
    %63 = arith.mulf %61, %62 : vector<1x6xf32>
    %cst_38 = arith.constant 9.99999974E-6 : f32
    %64 = vector.broadcast %cst_38 : f32 to vector<1x6xf32>
    %65 = arith.addf %63, %64 : vector<1x6xf32>
    %66 = math.rsqrt %65 : vector<1x6xf32>
    %67 = vector.broadcast %66 : vector<1x6xf32> to vector<20x6xf32>
    %68 = arith.mulf %56, %67 : vector<20x6xf32>
    %69 = arith.truncf %68 : vector<20x6xf32> to vector<20x6xbf16>
    %c0_39 = arith.constant 0 : index
    %c0_40 = arith.constant 0 : index
    %c0_41 = arith.constant 0 : index
    %70 = vector.load %arg5[%c0_39, %c0_40, %c0_41] : memref<1x20x6xbf16, #tpu.memory_space<vmem>>, vector<1x20x6xbf16>
    %71 = vector.shape_cast %70 : vector<1x20x6xbf16> to vector<20x6xbf16>
    %72 = vector.shape_cast %69 : vector<20x6xbf16> to vector<1x20x6xbf16>
    tpu.vector_store %arg5[%c0_39, %c0_40, %c0_41], %72 {strides = array<i32>} : memref<1x20x6xbf16, #tpu.memory_space<vmem>>, vector<1x20x6xbf16>,
    return
  }
  func.func @transform_0(%arg0: i32) -> (i32, i32, i32) {
    %c0_i32 = arith.constant 0 : i32
    %c0_i32_0 = arith.constant 0 : i32
    %c0_i32_1 = arith.constant 0 : i32
    return %arg0, %c0_i32, %c0_i32_0 : i32, i32, i32
  }
  func.func @transform_1(%arg0: i32) -> (i32, i32, i32) {
    %c0_i32 = arith.constant 0 : i32
    %c0_i32_0 = arith.constant 0 : i32
    %c0_i32_1 = arith.constant 0 : i32
    %c0_i32_2 = arith.constant 0 : i32
    return %c0_i32, %c0_i32_0, %c0_i32_1 : i32, i32, i32
  }
  func.func @transform_2(%arg0: i32) -> (i32, i32) {
    %c0_i32 = arith.constant 0 : i32
    %c0_i32_0 = arith.constant 0 : i32
    %c0_i32_1 = arith.constant 0 : i32
    return %c0_i32, %c0_i32_0 : i32, i32
  }
  func.func @transform_3(%arg0: i32) -> (i32, i32) {
    %c0_i32 = arith.constant 0 : i32
    %c0_i32_0 = arith.constant 0 : i32
    %c0_i32_1 = arith.constant 0 : i32
    return %c0_i32, %c0_i32_0 : i32, i32
  }
  func.func @transform_4(%arg0: i32) -> (i32, i32, i32) {
    %c0_i32 = arith.constant 0 : i32
    %c0_i32_0 = arith.constant 0 : i32
    %c0_i32_1 = arith.constant 0 : i32
    return %arg0, %c0_i32, %c0_i32_0 : i32, i32, i32
  }
}

</mosaic_0001>

<llo_original>
// kernel: tpu_custom_call.1
$region0: #{tpu_custom_call.1}
  #allocation0 [shape = 'u32[]', space=smem, size = 0x4, offset = 0x4, fixed_abs, tag = 'smem constant byte address 0x4 - core index']
  #allocation1 [shape = 'u32[144,128]{1,0:T(1,128)}', space=vmem, size = 0x12000, scoped, tag = 'internal scratch']
  %s0 = inlined_call_operand.vmem [shape: bf16[2,32,16], index: 0, kind: input, shape index: {}]
  %s1 = inlined_call_operand.vmem [shape: bf16[4,16,6], index: 1, kind: input, shape index: {}]
  %s2 = inlined_call_operand.vmem [shape: f32[1,6], index: 2, kind: input, shape index: {}]
  %s3 = inlined_call_operand.vmem [shape: f32[20,1], index: 3, kind: input, shape index: {}]
  %s4 = inlined_call_operand.vmem [shape: bf16[2,20,6], index: 4, kind: output, shape index: {}]
  %s5 = sld [smem:[#allocation0]]
  $region49: #{tpu_custom_call.1} parent=0
    _
  %s7 = ssub.s32 1, %s5
  %s8 = scalar_select 0, %s7, %s5
  loop: start=0, step=1, limit=4
  $region2: #{tpu_custom_call.1} parent=0 // loop_pre_header
    _
  $region3: #{tpu_custom_call.1} parent=0 // loop_header
    %s10 = sphi 0, %s14
    %p11 = scmp.ge.s32.totalorder %s10, 4
    %s20 = sphi 0, %s22
    %s23 = sphi 0, %s20
    %s24 = sphi 0, %s23
    %s40 = sphi 0, %s24
    %s44 = sphi 0, %s44
    %s46 = sphi 0, %s44
    %s47 = sphi 0, %s46
    %s61 = sphi 0, %s47
    %s65 = sphi 0, %s65
    %s67 = sphi 0, %s65
    %s68 = sphi 0, %s67
    %s82 = sphi 0, %s68
    %s86 = sphi 0, %s86
    %s88 = sphi 0, %s86
    %s89 = sphi 0, %s88
    %s103 = sphi 0, %s89
    %s109 = sphi 0, %s111
    %s112 = sphi 0, %s109
    %s113 = sphi 0, %s112
    %s129 = sphi 0, %s113
  $region4: #{tpu_custom_call.1} parent=0 // loop_header_branch
    %13 = sbr.rel (%p11) target = $region8
  $region5: #{tpu_custom_call.1} parent=0 // loop_body
    %s15 = ssub.s32 %s10, 1
    %s16 = ssub.s32 %s10, 2
    %s17 = sadd.s32 %s10, 1
    %s18 = ssub.s32 %s10, %s17
    %p19 = scmp.eq.s32.totalorder %s18, 0
    %s21 = sadd.s32 %s20, 1
    %s22 = scalar_select %p19, %s20, %s21
    %p25 = pneg %p19
    %p26 = scmp.eq.s32.totalorder %s10, 1
    %p27 = por %p25, %p26
    %p28 = scmp.ne.s32.totalorder %s20, %s23
    %p29 = scmp.eq.s32.totalorder %s10, 0
    %p30 = por %p28, %p29
    %p31 = scmp.ne.s32.totalorder %s20, %s23
    %p32 = scmp.eq.s32.totalorder %s15, 1
    %p33 = por %p31, %p32
    %p34 = scmp.ne.s32.totalorder %s23, %s24
    %p35 = scmp.eq.s32.totalorder %s15, 0
    %p36 = por %p34, %p35
    %p37 = scmp.ne.s32.totalorder %s23, %s24
    %p38 = scmp.eq.s32.totalorder %s16, 1
    %p39 = por %p37, %p38
    %p41 = scmp.ne.s32.totalorder %s24, %s40
    %p42 = scmp.eq.s32.totalorder %s16, 0
    %p43 = por %p41, %p42
    %s45 = sadd.s32 %s44, 1
    %p48 = scmp.eq.s32.totalorder %s10, 1
    %p49 = scmp.ne.s32.totalorder %s44, %s46
    %p50 = scmp.eq.s32.totalorder %s10, 0
    %p51 = por %p49, %p50
    %p52 = scmp.ne.s32.totalorder %s44, %s46
    %p53 = scmp.eq.s32.totalorder %s15, 1
    %p54 = por %p52, %p53
    %p55 = scmp.ne.s32.totalorder %s46, %s47
    %p56 = scmp.eq.s32.totalorder %s15, 0
    %p57 = por %p55, %p56
    %p58 = scmp.ne.s32.totalorder %s46, %s47
    %p59 = scmp.eq.s32.totalorder %s16, 1
    %p60 = por %p58, %p59
    %p62 = scmp.ne.s32.totalorder %s47, %s61
    %p63 = scmp.eq.s32.totalorder %s16, 0
    %p64 = por %p62, %p63
    %s66 = sadd.s32 %s65, 1
    %p69 = scmp.eq.s32.totalorder %s10, 1
    %p70 = scmp.ne.s32.totalorder %s65, %s67
    %p71 = scmp.eq.s32.totalorder %s10, 0
    %p72 = por %p70, %p71
    %p73 = scmp.ne.s32.totalorder %s65, %s67
    %p74 = scmp.eq.s32.totalorder %s15, 1
    %p75 = por %p73, %p74
    %p76 = scmp.ne.s32.totalorder %s67, %s68
    %p77 = scmp.eq.s32.totalorder %s15, 0
    %p78 = por %p76, %p77
    %p79 = scmp.ne.s32.totalorder %s67, %s68
    %p80 = scmp.eq.s32.totalorder %s16, 1
    %p81 = por %p79, %p80
    %p83 = scmp.ne.s32.totalorder %s68, %s82
    %p84 = scmp.eq.s32.totalorder %s16, 0
    %p85 = por %p83, %p84
    %s87 = sadd.s32 %s86, 1
    %p90 = scmp.eq.s32.totalorder %s10, 1
    %p91 = scmp.ne.s32.totalorder %s86, %s88
    %p92 = scmp.eq.s32.totalorder %s10, 0
    %p93 = por %p91, %p92
    %p94 = scmp.ne.s32.totalorder %s86, %s88
    %p95 = scmp.eq.s32.totalorder %s15, 1
    %p96 = por %p94, %p95
    %p97 = scmp.ne.s32.totalorder %s88, %s89
    %p98 = scmp.eq.s32.totalorder %s15, 0
    %p99 = por %p97, %p98
    %p100 = scmp.ne.s32.totalorder %s88, %s89
    %p101 = scmp.eq.s32.totalorder %s16, 1
    %p102 = por %p100, %p101
    %p104 = scmp.ne.s32.totalorder %s89, %s103
    %p105 = scmp.eq.s32.totalorder %s16, 0
    %p106 = por %p104, %p105
    %s107 = ssub.s32 %s10, %s17
    %p108 = scmp.eq.s32.totalorder %s107, 0
    %s110 = sadd.s32 %s109, 1
    %s111 = scalar_select %p108, %s109, %s110
    %p114 = pneg %p108
    %p115 = scmp.eq.s32.totalorder %s10, 1
    %p116 = por %p114, %p115
    %p117 = scmp.ne.s32.totalorder %s109, %s112
    %p118 = scmp.eq.s32.totalorder %s10, 0
    %p119 = por %p117, %p118
    %p120 = scmp.ne.s32.totalorder %s109, %s112
    %p121 = scmp.eq.s32.totalorder %s15, 1
    %p122 = por %p120, %p121
    %p123 = scmp.ne.s32.totalorder %s112, %s113
    %p124 = scmp.eq.s32.totalorder %s15, 0
    %p125 = por %p123, %p124
    %p126 = scmp.ne.s32.totalorder %s112, %s113
    %p127 = scmp.eq.s32.totalorder %s16, 1
    %p128 = por %p126, %p127
    %p130 = scmp.ne.s32.totalorder %s113, %s129
    %p131 = scmp.eq.s32.totalorder %s16, 0
    %p132 = por %p130, %p131
    %p133 = scmp.le.s32.totalorder 1, %s10
    %p134 = scmp.lt.s32.totalorder %s10, 3
    %p135 = pnand %p133, %p134
    %p136 = pneg %p135
    // Predicated region
    $region9: #{tpu_custom_call.1} parent=5 // pred_check
      _
    $region10: #{tpu_custom_call.1} parent=5 // pred_check_branch
      %138 = sbr.rel (%p135) target = $region12
    $region11: #{tpu_custom_call.1} parent=5 // pred_region
      %s139 = ssub.s32 %s10, 1
      // Predicated region
      $region13: #{tpu_custom_call.1} parent=11 // pred_check
        %p140 = pneg %p57
      $region14: #{tpu_custom_call.1} parent=11 // pred_check_branch
        %142 = sbr.rel (%p140) target = $region16
      $region15: #{tpu_custom_call.1} parent=11 // pred_region
        _
      $region16: #{tpu_custom_call.1} parent=11 // pred_fallthru
        _
      // Predicated region
      $region17: #{tpu_custom_call.1} parent=11 // pred_check
        %p143 = pneg %p78
      $region18: #{tpu_custom_call.1} parent=11 // pred_check_branch
        %145 = sbr.rel (%p143) target = $region20
      $region19: #{tpu_custom_call.1} parent=11 // pred_region
        _
      $region20: #{tpu_custom_call.1} parent=11 // pred_fallthru
        _
      // Predicated region
      $region21: #{tpu_custom_call.1} parent=11 // pred_check
        %p146 = pneg %p99
      $region22: #{tpu_custom_call.1} parent=11 // pred_check_branch
        %148 = sbr.rel (%p146) target = $region24
      $region23: #{tpu_custom_call.1} parent=11 // pred_region
        _
      $region24: #{tpu_custom_call.1} parent=11 // pred_fallthru
        _
    $region12: #{tpu_custom_call.1} parent=5 // pred_fallthru
      _
    %p149 = scmp.lt.s32.totalorder %s10, 2
    // Predicated region
    $region25: #{tpu_custom_call.1} parent=5 // pred_check
      %p150 = pneg %p149
    $region26: #{tpu_custom_call.1} parent=5 // pred_check_branch
      %152 = sbr.rel (%p150) target = $region28
    $region27: #{tpu_custom_call.1} parent=5 // pred_region
      // Predicated region
      $region29: #{tpu_custom_call.1} parent=27 // pred_check
        %p153 = pneg %p30
      $region30: #{tpu_custom_call.1} parent=27 // pred_check_branch
        %155 = sbr.rel (%p153) target = $region32
      $region31: #{tpu_custom_call.1} parent=27 // pred_region
        %p156 = scmp.lt.s32.totalorder %s10, 1
        %s157 = scalar_select %p156, %s10, 1
        %s158 = smul.addr %s157, 4
        %s159 = smul.addr %s158, 4
        %s160 = scalar_lea.vmem %s0, %s159
      $region32: #{tpu_custom_call.1} parent=27 // pred_fallthru
        _
    $region28: #{tpu_custom_call.1} parent=5 // pred_fallthru
      _
    %p161 = scmp.le.s32.totalorder 1, %s10
    %p162 = scmp.lt.s32.totalorder %s10, 3
    %p163 = pnand %p161, %p162
    %p164 = pneg %p163
    // Predicated region
    $region33: #{tpu_custom_call.1} parent=5 // pred_check
      _
    $region34: #{tpu_custom_call.1} parent=5 // pred_check_branch
      %166 = sbr.rel (%p163) target = $region36
    $region35: #{tpu_custom_call.1} parent=5 // pred_region
      %s167 = ssub.s32 %s10, 1
      %p168 = scmp.lt.s32.totalorder %s15, 1
      %s169 = scalar_select %p168, %s15, 1
      %s170 = smul.addr %s169, 4
      %s171 = smul.addr %s170, 4
      %s172 = scalar_lea.vmem %s0, %s171
      %p173 = pneg %p36
      %p174 = pneg %p33
      %p175 = pneg %p57
      %p176 = pneg %p54
      %p177 = pneg %p78
      %p178 = pneg %p75
      %p179 = pneg %p99
      %p180 = pneg %p96
      %p181 = pneg %p125
      %p182 = pneg %p122
      %p183 = scmp.lt.s32.totalorder %s15, 1
      %s184 = scalar_select %p183, %s15, 1
      %s185 = smul.addr %s184, 3
      %s186 = smul.addr %s185, 4
      %s187 = scalar_lea.vmem %s4, %s186
      %p188 = scmp.lt.s32.totalorder %s15, 1
      %s189 = scalar_select %p188, %s15, 1
      %s190 = smul.addr %s189, 4
      %s191 = smul.addr %s190, 4
      %s192 = scalar_lea.vmem %s0, %s191
      %p193 = scmp.lt.s32.totalorder %s15, 1
      %s194 = scalar_select %p193, %s15, 1
      %s195 = smul.addr %s194, 3
      %s196 = smul.addr %s195, 4
      %s197 = scalar_lea.vmem %s4, %s196
      %v200 = vld [vmem:[%s192] sm:$0xf]
      %v201 = vld [vmem:[%s192 + $0x4] sm:$0xf]
      %v202 = vld [vmem:[%s192 + $0x8] sm:$0x3]
      %vm203 = vcmp.ge.bf16.partialorder %v200, 0
      %vm204 = vcmp.ge.bf16.partialorder %v201, 0
      %vm205 = vcmp.ge.bf16.partialorder %v202, 0
      %v206 = vmul.bf16 %v200, 1045249613
      %v207 = vmul.bf16 %v201, 1045249613
      %v208 = vmul.bf16 %v202, 1045249613
      %v209 = vsel %vm203, %v200, %v206
      %v210 = vsel %vm204, %v201, %v207
      %v211 = vsel %vm205, %v202, %v208
      %v212 = vld [vmem:[%s1] sm:$0xf]
      %v213 = vld [vmem:[%s1 + $0x4] sm:$0xf]
      %v214 = vld [vmem:[%s192 + $0x8] sm:$0x7]
      %vm215 = vcmp.ge.bf16.partialorder %v214, 0
      %v216 = vmul.bf16 %v214, 1045249613
      %v217 = vsel %vm215, %v214, %v216
      %s218 = scalar_lea.vmem %s1, 8
      %v219 = vld [vmem:[%s218] sm:$0xf]
      %v220 = vld [vmem:[%s218 + $0x4] sm:$0xf]
      %v224 = vunpack.c.l.b16 %v209
      %v225 = vunpack.c.l.b16 %v210
      %v226 = vunpack.c.l.b16 %v217
      %v227 = vpack.c.b16 %v225, %v224
      %v228 = vpack.c.b16 %v226, %v226
      %vm229 = vsmask.f32 7424
      %v231 = vshrl.u32 %v227, 16
      %v233 = vshll.u32 %v227, 16
      %v235 = vrot.slane %v233, 1
      %v236 = vor.u32 %v231, %v235
      %v238 = vshll.u32 %v228, 16
      %v240 = vrot.slane %v238, 1
      %v241 = vsel %vm229, %v236, %v240
      %v242 = vshrl.u32 %v228, 16
      %v244 = vor.u32 %v242, %v240
      %v247 = vunpack.c.l.b16 %v219
      %v248 = vunpack.c.l.b16 %v220
      %v249 = vpack.c.b16 %v248, %v247
      %vm251 = vcmask 130048
      %v253 = vsel %vm251, %v241, 0
      %v256 = vsel %vm251, %v244, 0
      %258 = vmatprep.subr.bf16.mxu0 0
      %259 = vmatpush1.bf16.msra.mxu0 %v249
      %260 = vmatprep.subr.bf16.mxu0 0
      %261 = vmatpush1.bf16.msra.mxu0 0
      %262 = vmatprep.subr.bf16.mxu0 0
      %263 = vmatpush1.bf16.msra.mxu0 0
      %264 = vmatprep.subr.bf16.mxu0 0
      %265 = vmatpush1.bf16.msra.mxu0 0
      %266 = vmatprep.subr.bf16.mxu0 0
      %267 = vmatpush1.bf16.msra.mxu0 0
      %268 = vmatprep.subr.bf16.mxu0 0
      %269 = vmatpush1.bf16.msra.mxu0 0
      %270 = vmatprep.subr.bf16.mxu0 0
      %271 = vmatpush1.bf16.msra.mxu0 0
      %272 = vmatprep.subr.bf16.mxu0 0
      %273 = vmatpush1.bf16.msra.mxu0 0
      %274 = vmatprep.subr.bf16.mxu0 0
      %275 = vmatpush1.bf16.msra.mxu0 0
      %276 = vmatprep.subr.bf16.mxu0 0
      %277 = vmatpush1.bf16.msra.mxu0 0
      %278 = vmatprep.subr.bf16.mxu0 0
      %279 = vmatpush1.bf16.msra.mxu0 0
      %280 = vmatprep.subr.bf16.mxu0 0
      %281 = vmatpush1.bf16.msra.mxu0 0
      %282 = vmatprep.subr.bf16.mxu0 0
      %283 = vmatpush1.bf16.msra.mxu0 0
      %284 = vmatprep.subr.bf16.mxu0 0
      %285 = vmatpush1.bf16.msra.mxu0 0
      %286 = vmatprep.subr.bf16.mxu0 0
      %287 = vmatpush1.bf16.msra.mxu0 0
      %288 = vmatprep.subr.bf16.mxu0 0
      %289 = vmatpush1.bf16.msra.mxu0 0
      %290 = vmatprep.mubr.bf16.mxu0 0
      %291 = vmatmul.mubr.bf16.gmra.mrb[0].mxu0 %v253
      %v292 = vpop.f32.mrb[0].mxu0
      %v293 = vadd.f32 0.0, %v292
      %v294 = vpop.f32.mrb[0].mxu0
      %v295 = vpop.f32.mrb[0].mxu0
      %v296 = vadd.f32 0.0, %v295
      %v297 = vpop.f32.mrb[0].mxu0
      %298 = vmatprep.mubr.bf16.mxu0 0
      %299 = vmatmul.mubr.bf16.gmra.mrb[0].mxu0 %v256
      %v300 = vpop.f32.mrb[0].mxu0
      %v301 = vadd.f32 0.0, %v300
      %v302 = vpop.f32.mrb[0].mxu0
      %v303 = vpop.f32.mrb[0].mxu0
      %v304 = vpop.f32.mrb[0].mxu0
      %305 = vdwg.mxu0
      %v307 = vunpack.c.l.b16 %v211
      %v308 = vpack.c.b16 %v307, %v307
      %v311 = vunpack.c.l.b16 %v212
      %v312 = vunpack.c.l.b16 %v213
      %v313 = vpack.c.b16 %v312, %v311
      %v315 = vsel %vm251, %v227, 0
      %v318 = vsel %vm251, %v308, 0
      %320 = vmatprep.subr.bf16.mxu0 0
      %321 = vmatpush1.bf16.msra.mxu0 %v313
      %322 = vmatprep.subr.bf16.mxu0 0
      %323 = vmatpush1.bf16.msra.mxu0 0
      %324 = vmatprep.subr.bf16.mxu0 0
      %325 = vmatpush1.bf16.msra.mxu0 0
      %326 = vmatprep.subr.bf16.mxu0 0
      %327 = vmatpush1.bf16.msra.mxu0 0
      %328 = vmatprep.subr.bf16.mxu0 0
      %329 = vmatpush1.bf16.msra.mxu0 0
      %330 = vmatprep.subr.bf16.mxu0 0
      %331 = vmatpush1.bf16.msra.mxu0 0
      %332 = vmatprep.subr.bf16.mxu0 0
      %333 = vmatpush1.bf16.msra.mxu0 0
      %334 = vmatprep.subr.bf16.mxu0 0
      %335 = vmatpush1.bf16.msra.mxu0 0
      %336 = vmatprep.subr.bf16.mxu0 0
      %337 = vmatpush1.bf16.msra.mxu0 0
      %338 = vmatprep.subr.bf16.mxu0 0
      %339 = vmatpush1.bf16.msra.mxu0 0
      %340 = vmatprep.subr.bf16.mxu0 0
      %341 = vmatpush1.bf16.msra.mxu0 0
      %342 = vmatprep.subr.bf16.mxu0 0
      %343 = vmatpush1.bf16.msra.mxu0 0
      %344 = vmatprep.subr.bf16.mxu0 0
      %345 = vmatpush1.bf16.msra.mxu0 0
      %346 = vmatprep.subr.bf16.mxu0 0
      %347 = vmatpush1.bf16.msra.mxu0 0
      %348 = vmatprep.subr.bf16.mxu0 0
      %349 = vmatpush1.bf16.msra.mxu0 0
      %350 = vmatprep.subr.bf16.mxu0 0
      %351 = vmatpush1.bf16.msra.mxu0 0
      %352 = vmatprep.mubr.bf16.mxu0 0
      %353 = vmatmul.mubr.bf16.gmra.mrb[0].mxu0 %v315
      %v354 = vpop.f32.mrb[0].mxu0
      %v355 = vadd.f32 %v293, %v354
      %v356 = vpop.f32.mrb[0].mxu0
      %v357 = vpop.f32.mrb[0].mxu0
      %v358 = vadd.f32 %v296, %v357
      %v359 = vpop.f32.mrb[0].mxu0
      %360 = vmatprep.mubr.bf16.mxu0 0
      %361 = vmatmul.mubr.bf16.gmra.mrb[0].mxu0 %v318
      %v362 = vpop.f32.mrb[0].mxu0
      %v363 = vadd.f32 %v301, %v362
      %v364 = vpop.f32.mrb[0].mxu0
      %v365 = vpop.f32.mrb[0].mxu0
      %v366 = vpop.f32.mrb[0].mxu0
      %367 = vdwg.mxu0
      %v368 = vld [vmem:[%s192] sm:$0xc]
      %v369 = vld [vmem:[%s192 + $0x4] sm:$0xf]
      %v370 = vld [vmem:[%s192 + $0x8] sm:$0xf]
      %v371 = vld [vmem:[%s192 + $0xc] sm:$0x1]
      %vm372 = vcmp.ge.bf16.partialorder %v368, 0
      %vm373 = vcmp.ge.bf16.partialorder %v369, 0
      %vm374 = vcmp.ge.bf16.partialorder %v370, 0
      %vm375 = vcmp.ge.bf16.partialorder %v371, 0
      %v376 = vmul.bf16 %v368, 1045249613
      %v377 = vmul.bf16 %v369, 1045249613
      %v378 = vmul.bf16 %v370, 1045249613
      %v379 = vmul.bf16 %v371, 1045249613
      %v380 = vsel %vm372, %v368, %v376
      %v381 = vsel %vm373, %v369, %v377
      %v382 = vsel %vm374, %v370, %v378
      %v383 = vsel %vm375, %v371, %v379
      %s384 = scalar_lea.vmem %s1, 16
      %v385 = vld [vmem:[%s384] sm:$0xf]
      %v386 = vld [vmem:[%s384 + $0x4] sm:$0xf]
      %v391 = vunpack.c.l.b16 %v380
      %v392 = vunpack.c.l.b16 %v381
      %v393 = vunpack.c.l.b16 %v382
      %v394 = vunpack.c.l.b16 %v383
      %v395 = vpack.c.b16 %v392, %v391
      %v396 = vpack.c.b16 %v394, %v393
      %vm397 = vsmask.f32 5376
      %v399 = vshrl.u32 %v395, 16
      %v401 = vrot.slane %v399, 2
      %v402 = vshll.u32 %v395, 16
      %v404 = vrot.slane %v402, 3
      %v405 = vor.u32 %v401, %v404
      %v407 = vshrl.u32 %v396, 16
      %v409 = vrot.slane %v407, 2
      %v410 = vshll.u32 %v396, 16
      %v412 = vrot.slane %v410, 3
      %v413 = vor.u32 %v409, %v412
      %v414 = vsel %vm397, %v405, %v413
      %v417 = vunpack.c.l.b16 %v385
      %v418 = vunpack.c.l.b16 %v386
      %v419 = vpack.c.b16 %v418, %v417
      %v422 = vsel %vm251, %v414, 0
      %v425 = vsel %vm251, %v413, 0
      %427 = vmatprep.subr.bf16.mxu0 0
      %428 = vmatpush1.bf16.msra.mxu0 %v419
      %429 = vmatprep.subr.bf16.mxu0 0
      %430 = vmatpush1.bf16.msra.mxu0 0
      %431 = vmatprep.subr.bf16.mxu0 0
      %432 = vmatpush1.bf16.msra.mxu0 0
      %433 = vmatprep.subr.bf16.mxu0 0
      %434 = vmatpush1.bf16.msra.mxu0 0
      %435 = vmatprep.subr.bf16.mxu0 0
      %436 = vmatpush1.bf16.msra.mxu0 0
      %437 = vmatprep.subr.bf16.mxu0 0
      %438 = vmatpush1.bf16.msra.mxu0 0
      %439 = vmatprep.subr.bf16.mxu0 0
      %440 = vmatpush1.bf16.msra.mxu0 0
      %441 = vmatprep.subr.bf16.mxu0 0
      %442 = vmatpush1.bf16.msra.mxu0 0
      %443 = vmatprep.subr.bf16.mxu0 0
      %444 = vmatpush1.bf16.msra.mxu0 0
      %445 = vmatprep.subr.bf16.mxu0 0
      %446 = vmatpush1.bf16.msra.mxu0 0
      %447 = vmatprep.subr.bf16.mxu0 0
      %448 = vmatpush1.bf16.msra.mxu0 0
      %449 = vmatprep.subr.bf16.mxu0 0
      %450 = vmatpush1.bf16.msra.mxu0 0
      %451 = vmatprep.subr.bf16.mxu0 0
      %452 = vmatpush1.bf16.msra.mxu0 0
      %453 = vmatprep.subr.bf16.mxu0 0
      %454 = vmatpush1.bf16.msra.mxu0 0
      %455 = vmatprep.subr.bf16.mxu0 0
      %456 = vmatpush1.bf16.msra.mxu0 0
      %457 = vmatprep.subr.bf16.mxu0 0
      %458 = vmatpush1.bf16.msra.mxu0 0
      %459 = vmatprep.mubr.bf16.mxu0 0
      %460 = vmatmul.mubr.bf16.gmra.mrb[0].mxu0 %v422
      %v461 = vpop.f32.mrb[0].mxu0
      %v462 = vadd.f32 0.0, %v461
      %v463 = vpop.f32.mrb[0].mxu0
      %v464 = vpop.f32.mrb[0].mxu0
      %v465 = vadd.f32 0.0, %v464
      %v466 = vpop.f32.mrb[0].mxu0
      %467 = vmatprep.mubr.bf16.mxu0 0
      %468 = vmatmul.mubr.bf16.gmra.mrb[0].mxu0 %v425
      %v469 = vpop.f32.mrb[0].mxu0
      %v470 = vadd.f32 0.0, %v469
      %v471 = vpop.f32.mrb[0].mxu0
      %v472 = vpop.f32.mrb[0].mxu0
      %v473 = vpop.f32.mrb[0].mxu0
      %474 = vdwg.mxu0
      %v475 = vadd.f32 %v355, %v462
      %v476 = vadd.f32 %v358, %v465
      %v477 = vadd.f32 %v363, %v470
      %v478 = vld [vmem:[%s192] sm:$0x8]
      %vm479 = vcmp.ge.bf16.partialorder %v478, 0
      %v480 = vmul.bf16 %v478, 1045249613
      %v481 = vsel %vm479, %v478, %v480
      %s482 = scalar_lea.vmem %s1, 24
      %v483 = vld [vmem:[%s482] sm:$0xf]
      %v484 = vld [vmem:[%s482 + $0x4] sm:$0xf]
      %v486 = vunpack.c.l.b16 %v481
      %v487 = vpack.c.b16 %v392, %v486
      %vm488 = vcmask 1044480
      %v489 = vrot.slane %v487, 3
      %v490 = vrot.slane %v396, 3
      %v491 = vsel %vm488, %v489, %v490
      %v494 = vunpack.c.l.b16 %v483
      %v495 = vunpack.c.l.b16 %v484
      %v496 = vpack.c.b16 %v495, %v494
      %v499 = vsel %vm251, %v491, 0
      %v502 = vsel %vm251, %v490, 0
      %504 = vmatprep.subr.bf16.mxu0 0
      %505 = vmatpush1.bf16.msra.mxu0 %v496
      %506 = vmatprep.subr.bf16.mxu0 0
      %507 = vmatpush1.bf16.msra.mxu0 0
      %508 = vmatprep.subr.bf16.mxu0 0
      %509 = vmatpush1.bf16.msra.mxu0 0
      %510 = vmatprep.subr.bf16.mxu0 0
      %511 = vmatpush1.bf16.msra.mxu0 0
      %512 = vmatprep.subr.bf16.mxu0 0
      %513 = vmatpush1.bf16.msra.mxu0 0
      %514 = vmatprep.subr.bf16.mxu0 0
      %515 = vmatpush1.bf16.msra.mxu0 0
      %516 = vmatprep.subr.bf16.mxu0 0
      %517 = vmatpush1.bf16.msra.mxu0 0
      %518 = vmatprep.subr.bf16.mxu0 0
      %519 = vmatpush1.bf16.msra.mxu0 0
      %520 = vmatprep.subr.bf16.mxu0 0
      %521 = vmatpush1.bf16.msra.mxu0 0
      %522 = vmatprep.subr.bf16.mxu0 0
      %523 = vmatpush1.bf16.msra.mxu0 0
      %524 = vmatprep.subr.bf16.mxu0 0
      %525 = vmatpush1.bf16.msra.mxu0 0
      %526 = vmatprep.subr.bf16.mxu0 0
      %527 = vmatpush1.bf16.msra.mxu0 0
      %528 = vmatprep.subr.bf16.mxu0 0
      %529 = vmatpush1.bf16.msra.mxu0 0
      %530 = vmatprep.subr.bf16.mxu0 0
      %531 = vmatpush1.bf16.msra.mxu0 0
      %532 = vmatprep.subr.bf16.mxu0 0
      %533 = vmatpush1.bf16.msra.mxu0 0
      %534 = vmatprep.subr.bf16.mxu0 0
      %535 = vmatpush1.bf16.msra.mxu0 0
      %536 = vmatprep.mubr.bf16.mxu0 0
      %537 = vmatmul.mubr.bf16.gmra.mrb[0].mxu0 %v499
      %v538 = vpop.f32.mrb[0].mxu0
      %v539 = vadd.f32 0.0, %v538
      %v540 = vpop.f32.mrb[0].mxu0
      %v541 = vpop.f32.mrb[0].mxu0
      %v542 = vadd.f32 0.0, %v541
      %v543 = vpop.f32.mrb[0].mxu0
      %544 = vmatprep.mubr.bf16.mxu0 0
      %545 = vmatmul.mubr.bf16.gmra.mrb[0].mxu0 %v502
      %v546 = vpop.f32.mrb[0].mxu0
      %v547 = vadd.f32 0.0, %v546
      %v548 = vpop.f32.mrb[0].mxu0
      %v549 = vpop.f32.mrb[0].mxu0
      %v550 = vpop.f32.mrb[0].mxu0
      %551 = vdwg.mxu0
      %v552 = vadd.f32 %v475, %v539
      %v553 = vadd.f32 %v476, %v542
      %v554 = vadd.f32 %v477, %v547
      %v555 = vld [vmem:[%s2] sm:$0x1]
      %v557 = vlaneseq
      %v558 = vshrl.u32 %v557, 7
      %v559 = vsub.s32 0, %v558
      %v560 = vrot.slane %v555, %v559
      %v562 = vadd.f32 %v552, %v560
      %v563 = vadd.f32 %v553, %v560
      %v564 = vadd.f32 %v554, %v560
      %v565 = vld [vmem:[%s3] sm:$0xff]
      %v566 = vld [vmem:[%s3 + $0x8] sm:$0xff]
      %v567 = vld [vmem:[%s3 + $0x10] sm:$0xf]
      %569 = vset.pattern.permute.xlu0 0
      %570 = vperm.xlu0 %569, %v565
      %v571 = vpop.permute.xlu0 %570
      %574 = vset.pattern.permute.xlu0 0
      %575 = vperm.xlu0 %574, %v566
      %v576 = vpop.permute.xlu0 %575
      %579 = vset.pattern.permute.xlu0 0
      %580 = vperm.xlu0 %579, %v567
      %v581 = vpop.permute.xlu0 %580
      %v583 = vmul.f32 %v562, %v571
      %v584 = vmul.f32 %v563, %v576
      %v585 = vmul.f32 %v564, %v581
      %vm586 = vcmask 48128
      %v587 = vsel %vm586, %v583, 0.0
      %v588 = vsel %vm586, %v584, 0.0
      %v589 = vadd.f32 %v587, %v588
      %vm590 = vcmask 44032
      %v591 = vsel %vm590, %v585, 0.0
      %v592 = vadd.f32 %v589, %v591
      %v593 = vrot.slane %v592, 4
      %v594 = vadd.f32 %v592, %v593
      %v595 = vrot.slane %v594, 2
      %v596 = vadd.f32 %v594, %v595
      %v597 = vrot.slane %v596, 1
      %v598 = vadd.f32 %v596, %v597
      %v599 = vmul.f32 %v598, 0.0625
      %v600 = vsub.f32 %v562, %v599
      %v601 = vsub.f32 %v563, %v599
      %v602 = vsub.f32 %v564, %v599
      %v603 = vmul.f32 %v600, %v600
      %v604 = vmul.f32 %v601, %v601
      %v605 = vmul.f32 %v602, %v602
      %v606 = vmul.f32 %v603, %v571
      %v607 = vmul.f32 %v604, %v576
      %v608 = vmul.f32 %v605, %v581
      %v609 = vsel %vm586, %v606, 0.0
      %v610 = vsel %vm586, %v607, 0.0
      %v611 = vadd.f32 %v609, %v610
      %v612 = vsel %vm590, %v608, 0.0
      %v613 = vadd.f32 %v611, %v612
      %v614 = vrot.slane %v613, 4
      %v615 = vadd.f32 %v613, %v614
      %v616 = vrot.slane %v615, 2
      %v617 = vadd.f32 %v615, %v616
      %v618 = vrot.slane %v617, 1
      %v619 = vadd.f32 %v617, %v618
      %v620 = vmul.f32 %v619, 0.0625
      %v621 = vadd.f32 %v620, 1e-05
      %v622 = vrsqrt.pop %v621
      %v623 = vmul.f32 %v600, %v622
      %v624 = vmul.f32 %v601, %v622
      %v625 = vmul.f32 %v602, %v622
      %v626 = vpack.c.bf16 %v624, %v623
      %v627 = vpack.c.bf16 %v625, %v625
      %v630 = vunpack.c.l.b16 %v626
      %v631 = vunpack.c.h.b16 %v626
      %v632 = vunpack.c.l.b16 %v627
      %v633 = vpack.c.b16 %v630, %v630
      %v634 = vpack.c.b16 %v631, %v631
      %v635 = vpack.c.b16 %v632, %v632
      %639 = vst.msk [vmem:[%s197] sm:$0xf] %vm590, %v633
      %640 = vst.msk [vmem:[%s197 + $0x4] sm:$0xf] %vm590, %v634
      %vm641 = vcmask 41984
      %642 = vst.msk [vmem:[%s197 + $0x8] sm:$0x3] %vm641, %v635
      %p643 = scmp.lt.s32.totalorder %s15, 1
      %s644 = scalar_select %p643, %s15, 1
      %s645 = smul.addr %s644, 3
      %s646 = smul.addr %s645, 4
      %s647 = scalar_lea.vmem %s4, %s646
      // Predicated region
      $region37: #{tpu_custom_call.1} parent=35 // pred_check
        %p648 = pneg %p122
      $region38: #{tpu_custom_call.1} parent=35 // pred_check_branch
        %650 = sbr.rel (%p648) target = $region40
      $region39: #{tpu_custom_call.1} parent=35 // pred_region
        _
      $region40: #{tpu_custom_call.1} parent=35 // pred_fallthru
        _
    $region36: #{tpu_custom_call.1} parent=5 // pred_fallthru
      _
    %p651 = scmp.le.s32.totalorder 2, %s10
    // Predicated region
    $region41: #{tpu_custom_call.1} parent=5 // pred_check
      %p652 = pneg %p651
    $region42: #{tpu_custom_call.1} parent=5 // pred_check_branch
      %654 = sbr.rel (%p652) target = $region44
    $region43: #{tpu_custom_call.1} parent=5 // pred_region
      %s655 = ssub.s32 %s10, 2
      // Predicated region
      $region45: #{tpu_custom_call.1} parent=43 // pred_check
        %p656 = pneg %p128
      $region46: #{tpu_custom_call.1} parent=43 // pred_check_branch
        %658 = sbr.rel (%p656) target = $region48
      $region47: #{tpu_custom_call.1} parent=43 // pred_region
        %p659 = scmp.lt.s32.totalorder %s16, 1
        %s660 = scalar_select %p659, %s16, 1
        %s661 = smul.addr %s660, 3
        %s662 = smul.addr %s661, 4
        %s663 = scalar_lea.vmem %s4, %s662
      $region48: #{tpu_custom_call.1} parent=43 // pred_fallthru
        _
    $region44: #{tpu_custom_call.1} parent=5 // pred_fallthru
      _
  $region6: #{tpu_custom_call.1} parent=0 // loop_footer
    %s14 = sadd.s32 1, %s10
  $region7: #{tpu_custom_call.1} parent=0 // loop_footer_branch
    %9 = sbr.rel target = $region3
  $region8: #{tpu_custom_call.1} parent=0 // loop_exit
    _

</llo_original>
